<compile_context>
chip_gen: v5e
topology: v5e:2x2
jax: 0.10.0
libtpu: 0.0.40
codegen_flags: <defaults>
</compile_context>

<pallas_src>
import functools

import jax
import jax.numpy as jnp
from jax.experimental import pallas as pl
from jax.experimental.pallas import tpu as pltpu


def _attention_kernel(x_ref, wqkv_ref, wo_ref, bo_ref, o_ref, *,
                      heads, dim_head, scale):
    """One batch element of multi-head attention + output projection.

    x_ref    : (1, N, D)          input tokens for this batch element
    wqkv_ref : (D, 3*inner) bf16  fused [Wq | Wk | Wv] projection weights
    wo_ref   : (inner, D)   bf16  output projection weight
    bo_ref   : (1, D)       f32   output projection bias
    o_ref    : (1, N, D)          output
    """
    inner = heads * dim_head

    x = x_ref[0].astype(jnp.bfloat16)                    # (N, D)

    # Fused QKV projection: one lane-dense MXU matmul, f32 accumulation.
    qkv = jnp.dot(x, wqkv_ref[...],
                  preferred_element_type=jnp.float32)    # (N, 3*inner) f32
    q = qkv[:, 0 * inner:1 * inner]
    k = qkv[:, 1 * inner:2 * inner]
    v = qkv[:, 2 * inner:3 * inner]

    # Per-head scaled dot-product attention (heads unrolled; static lane slices).
    outs = []
    for h in range(heads):
        lo, hi = h * dim_head, (h + 1) * dim_head
        q_h = q[:, lo:hi].astype(jnp.bfloat16)           # (N, Dh)
        k_h = k[:, lo:hi].astype(jnp.bfloat16)           # (N, Dh)
        v_h = v[:, lo:hi].astype(jnp.bfloat16)           # (N, Dh)

        dots = jnp.dot(q_h, k_h.T,
                       preferred_element_type=jnp.float32) * scale   # (N, N) f32
        dots = dots - jnp.max(dots, axis=-1, keepdims=True)
        p = jnp.exp(dots)
        attn = p * pl.reciprocal(jnp.sum(p, axis=-1, keepdims=True), approx=True)

        out_h = jnp.dot(attn.astype(jnp.bfloat16), v_h,
                        preferred_element_type=jnp.float32)           # (N, Dh) f32
        outs.append(out_h)

    out = jnp.concatenate(outs, axis=-1)                 # (N, inner) f32

    # Single full-width output projection + bias.
    y = jnp.dot(out.astype(jnp.bfloat16), wo_ref[...],
                preferred_element_type=jnp.float32)      # (N, D) f32
    o_ref[0] = (y + bo_ref[...]).astype(o_ref.dtype)


def attention_pallas(x, w_q, w_k, w_v, w_out, b_out, *, heads, dim_head):
    """x: (B, N, D); weights stored as (in, out) matrices; returns (B, N, D)."""
    B, N, D = x.shape
    inner = heads * dim_head
    assert w_q.shape == (D, inner) and w_k.shape == (D, inner)
    assert w_v.shape == (D, inner) and w_out.shape == (inner, D)
    scale = dim_head ** (-0.5)

    # Fuse QKV weights once on the host/XLA side; cast weights to bf16 so the
    # VMEM-resident copy (and its DMA) is half-size.  Bias stays f32.
    w_qkv = jnp.concatenate([w_q, w_k, w_v], axis=1).astype(jnp.bfloat16)  # (D, 3*inner)
    w_o = w_out.astype(jnp.bfloat16)                                       # (inner, D)
    b_o = b_out.astype(jnp.float32)                                        # (1, D)

    kernel = functools.partial(_attention_kernel,
                               heads=heads, dim_head=dim_head, scale=scale)

    return pl.pallas_call(
        kernel,
        out_shape=jax.ShapeDtypeStruct((B, N, D), x.dtype),
        grid_spec=pltpu.PrefetchScalarGridSpec(
            num_scalar_prefetch=0,
            grid=(B,),
            in_specs=[
                # x: one batch element per grid step.
                pl.BlockSpec((1, N, D), lambda b: (b, 0, 0)),
                # Weights: full arrays, constant index_map -> DMA'd once,
                # stay resident in VMEM across all grid steps.
                pl.BlockSpec((D, 3 * inner), lambda b: (0, 0)),
                pl.BlockSpec((inner, D), lambda b: (0, 0)),
                pl.BlockSpec((1, D), lambda b: (0, 0)),
            ],
            out_specs=pl.BlockSpec((1, N, D), lambda b: (b, 0, 0)),
        ),
        compiler_params=pltpu.CompilerParams(
            dimension_semantics=("parallel",)),
    )(x, w_qkv, w_o, b_o)


def attention_ref(x, w_q, w_k, w_v, w_out, b_out, *, heads, dim_head):
    """Pure-JAX f32 reference mirroring the PyTorch forward (y=None, dropout off)."""
    B, N, D = x.shape
    scale = dim_head ** (-0.5)
    q = x @ w_q
    k = x @ w_k
    v = x @ w_v

    def split(t):  # b n (h d) -> b h n d
        return t.reshape(B, N, heads, dim_head).transpose(0, 2, 1, 3)

    q, k, v = split(q), split(k), split(v)
    dots = jnp.einsum('bhid,bhjd->bhij', q, k) * scale
    attn = jax.nn.softmax(dots, axis=-1)
    out = jnp.einsum('bhij,bhjd->bhid', attn, v)
    out = out.transpose(0, 2, 1, 3).reshape(B, N, heads * dim_head)
    return out @ w_out + b_out


if __name__ == "__main__":
    # Small shapes consistent with the module.
    B, N, D = 2, 8, 32
    HEADS, DIM_HEAD = 4, 16
    INNER = HEADS * DIM_HEAD  # 64; project_out=True since heads != 1

    key = jax.random.PRNGKey(0)
    kx, kq, kk, kv, ko, kb = jax.random.split(key, 6)

    x = jax.random.normal(kx, (B, N, D), dtype=jnp.float32)
    # Weights stored as (in_features, out_features); equivalent to PyTorch's W.T.
    w_q = jax.random.normal(kq, (D, INNER), dtype=jnp.float32) * 0.05
    w_k = jax.random.normal(kk, (D, INNER), dtype=jnp.float32) * 0.05
    w_v = jax.random.normal(kv, (D, INNER), dtype=jnp.float32) * 0.05
    w_out = jax.random.normal(ko, (INNER, D), dtype=jnp.float32) * 0.05
    b_out = jax.random.normal(kb, (1, D), dtype=jnp.float32) * 0.05
    # TODO(synk): dropout (p=0.0 default) is an inference no-op; not implemented in-kernel.

    out = attention_pallas(x, w_q, w_k, w_v, w_out, b_out,
                           heads=HEADS, dim_head=DIM_HEAD)
    jax.block_until_ready(out)

    ref = attention_ref(x, w_q, w_k, w_v, w_out, b_out,
                        heads=HEADS, dim_head=DIM_HEAD)
    assert out.shape == (B, N, D)
    # bf16 matmul operands (f32 accumulation) -> loosened tolerance vs f32 ref.
    assert jnp.allclose(out, ref, atol=2e-2, rtol=2e-2), (
        f"max abs err = {jnp.max(jnp.abs(out - ref))}")

    print("KERNEL_OK")
</pallas_src>

<mosaic_0001>
module attributes {stable_mosaic.version = 11 : i64} {
  func.func @_attention_kernel(%arg0: i32, %arg1: memref<1x8x32xf32, #tpu.memory_space<vmem>>, %arg2: memref<32x192xbf16, #tpu.memory_space<vmem>>, %arg3: memref<64x32xbf16, #tpu.memory_space<vmem>>, %arg4: memref<1x32xf32, #tpu.memory_space<vmem>>, %arg5: memref<1x8x32xf32, #tpu.memory_space<vmem>>) attributes {dimension_semantics = [#tpu.dimension_semantics<parallel>], iteration_bounds = array<i64: 2>, scalar_prefetch = 0 : i64, scratch_operands = 0 : i64, tpu.core_type = #tpu.core_type<tc>, window_params = [{transform_indices = @transform_0, window_bounds = array<i64: 1, 8, 32>}, {pipeline_mode = #tpu.pipeline_mode<synchronous>, transform_indices = @transform_1, window_bounds = array<i64: 32, 192>}, {pipeline_mode = #tpu.pipeline_mode<synchronous>, transform_indices = @transform_2, window_bounds = array<i64: 64, 32>}, {pipeline_mode = #tpu.pipeline_mode<synchronous>, transform_indices = @transform_3, window_bounds = array<i64: 1, 32>}, {transform_indices = @transform_4, window_bounds = array<i64: 1, 8, 32>}]} {
    %c0 = arith.constant 0 : index
    %c0_0 = arith.constant 0 : index
    %c0_1 = arith.constant 0 : index
    %0 = vector.load %arg1[%c0, %c0_0, %c0_1] : memref<1x8x32xf32, #tpu.memory_space<vmem>>, vector<1x8x32xf32>
    %1 = vector.shape_cast %0 : vector<1x8x32xf32> to vector<8x32xf32>
    %2 = arith.truncf %1 : vector<8x32xf32> to vector<8x32xbf16>
    %c0_2 = arith.constant 0 : index
    %c0_3 = arith.constant 0 : index
    %3 = vector.load %arg2[%c0_2, %c0_3] : memref<32x192xbf16, #tpu.memory_space<vmem>>, vector<32x192xbf16>
    %cst = arith.constant dense<0.000000e+00> : vector<8x192xf32>
    %4 = tpu.matmul %2, %3, %cst {dimension_numbers = #tpu.dot_dimension_numbers<[1], [0], [0], [1], [0, 0, 1, 1], [], []>} : vector<8x32xbf16>, vector<32x192xbf16>, vector<8x192xf32> -> vector<8x192xf32>
    %5 = vector.extract_strided_slice %4 {offsets = [0, 0], sizes = [8, 64], strides = [1, 1]} : vector<8x192xf32> to vector<8x64xf32>
    %6 = vector.extract_strided_slice %4 {offsets = [0, 64], sizes = [8, 64], strides = [1, 1]} : vector<8x192xf32> to vector<8x64xf32>
    %7 = vector.extract_strided_slice %4 {offsets = [0, 128], sizes = [8, 64], strides = [1, 1]} : vector<8x192xf32> to vector<8x64xf32>
    %8 = vector.extract_strided_slice %5 {offsets = [0, 0], sizes = [8, 16], strides = [1, 1]} : vector<8x64xf32> to vector<8x16xf32>
    %9 = arith.truncf %8 : vector<8x16xf32> to vector<8x16xbf16>
    %10 = vector.extract_strided_slice %6 {offsets = [0, 0], sizes = [8, 16], strides = [1, 1]} : vector<8x64xf32> to vector<8x16xf32>
    %11 = arith.truncf %10 : vector<8x16xf32> to vector<8x16xbf16>
    %12 = vector.extract_strided_slice %7 {offsets = [0, 0], sizes = [8, 16], strides = [1, 1]} : vector<8x64xf32> to vector<8x16xf32>
    %13 = arith.truncf %12 : vector<8x16xf32> to vector<8x16xbf16>
    %14 = tpu.transpose %11, [1, 0] : vector<8x16xbf16> -> vector<16x8xbf16>
    %cst_4 = arith.constant dense<0.000000e+00> : vector<8x8xf32>
    %15 = tpu.matmul %9, %14, %cst_4 {dimension_numbers = #tpu.dot_dimension_numbers<[1], [0], [0], [1], [0, 0, 1, 1], [], []>} : vector<8x16xbf16>, vector<16x8xbf16>, vector<8x8xf32> -> vector<8x8xf32>
    %cst_5 = arith.constant 2.500000e-01 : f32
    %16 = vector.broadcast %cst_5 : f32 to vector<8x8xf32>
    %17 = arith.mulf %15, %16 : vector<8x8xf32>
    %cst_6 = arith.constant dense<0xFF800000> : vector<8xf32>
    %18 = vector.multi_reduction <maximumf>, %17, %cst_6 [1] : vector<8x8xf32> to vector<8xf32>
    %19 = vector.shape_cast %18 : vector<8xf32> to vector<8x1xf32>
    %20 = vector.broadcast %19 : vector<8x1xf32> to vector<8x8xf32>
    %21 = arith.subf %17, %20 : vector<8x8xf32>
    %22 = math.exp %21 : vector<8x8xf32>
    %cst_7 = arith.constant dense<0.000000e+00> : vector<8xf32>
    %23 = vector.multi_reduction <add>, %22, %cst_7 [1] : vector<8x8xf32> to vector<8xf32>
    %24 = vector.shape_cast %23 : vector<8xf32> to vector<8x1xf32>
    %25 = tpu.reciprocal %24 {approx = true} : vector<8x1xf32> -> vector<8x1xf32>
    %26 = vector.broadcast %25 : vector<8x1xf32> to vector<8x8xf32>
    %27 = arith.mulf %22, %26 : vector<8x8xf32>
    %28 = arith.truncf %27 : vector<8x8xf32> to vector<8x8xbf16>
    %cst_8 = arith.constant dense<0.000000e+00> : vector<8x16xf32>
    %29 = tpu.matmul %28, %13, %cst_8 {dimension_numbers = #tpu.dot_dimension_numbers<[1], [0], [0], [1], [0, 0, 1, 1], [], []>} : vector<8x8xbf16>, vector<8x16xbf16>, vector<8x16xf32> -> vector<8x16xf32>
    %30 = vector.extract_strided_slice %5 {offsets = [0, 16], sizes = [8, 16], strides = [1, 1]} : vector<8x64xf32> to vector<8x16xf32>
    %31 = arith.truncf %30 : vector<8x16xf32> to vector<8x16xbf16>
    %32 = vector.extract_strided_slice %6 {offsets = [0, 16], sizes = [8, 16], strides = [1, 1]} : vector<8x64xf32> to vector<8x16xf32>
    %33 = arith.truncf %32 : vector<8x16xf32> to vector<8x16xbf16>
    %34 = vector.extract_strided_slice %7 {offsets = [0, 16], sizes = [8, 16], strides = [1, 1]} : vector<8x64xf32> to vector<8x16xf32>
    %35 = arith.truncf %34 : vector<8x16xf32> to vector<8x16xbf16>
    %36 = tpu.transpose %33, [1, 0] : vector<8x16xbf16> -> vector<16x8xbf16>
    %cst_9 = arith.constant dense<0.000000e+00> : vector<8x8xf32>
    %37 = tpu.matmul %31, %36, %cst_9 {dimension_numbers = #tpu.dot_dimension_numbers<[1], [0], [0], [1], [0, 0, 1, 1], [], []>} : vector<8x16xbf16>, vector<16x8xbf16>, vector<8x8xf32> -> vector<8x8xf32>
    %cst_10 = arith.constant 2.500000e-01 : f32
    %38 = vector.broadcast %cst_10 : f32 to vector<8x8xf32>
    %39 = arith.mulf %37, %38 : vector<8x8xf32>
    %cst_11 = arith.constant dense<0xFF800000> : vector<8xf32>
    %40 = vector.multi_reduction <maximumf>, %39, %cst_11 [1] : vector<8x8xf32> to vector<8xf32>
    %41 = vector.shape_cast %40 : vector<8xf32> to vector<8x1xf32>
    %42 = vector.broadcast %41 : vector<8x1xf32> to vector<8x8xf32>
    %43 = arith.subf %39, %42 : vector<8x8xf32>
    %44 = math.exp %43 : vector<8x8xf32>
    %cst_12 = arith.constant dense<0.000000e+00> : vector<8xf32>
    %45 = vector.multi_reduction <add>, %44, %cst_12 [1] : vector<8x8xf32> to vector<8xf32>
    %46 = vector.shape_cast %45 : vector<8xf32> to vector<8x1xf32>
    %47 = tpu.reciprocal %46 {approx = true} : vector<8x1xf32> -> vector<8x1xf32>
    %48 = vector.broadcast %47 : vector<8x1xf32> to vector<8x8xf32>
    %49 = arith.mulf %44, %48 : vector<8x8xf32>
    %50 = arith.truncf %49 : vector<8x8xf32> to vector<8x8xbf16>
    %cst_13 = arith.constant dense<0.000000e+00> : vector<8x16xf32>
    %51 = tpu.matmul %50, %35, %cst_13 {dimension_numbers = #tpu.dot_dimension_numbers<[1], [0], [0], [1], [0, 0, 1, 1], [], []>} : vector<8x8xbf16>, vector<8x16xbf16>, vector<8x16xf32> -> vector<8x16xf32>
    %52 = vector.extract_strided_slice %5 {offsets = [0, 32], sizes = [8, 16], strides = [1, 1]} : vector<8x64xf32> to vector<8x16xf32>
    %53 = arith.truncf %52 : vector<8x16xf32> to vector<8x16xbf16>
    %54 = vector.extract_strided_slice %6 {offsets = [0, 32], sizes = [8, 16], strides = [1, 1]} : vector<8x64xf32> to vector<8x16xf32>
    %55 = arith.truncf %54 : vector<8x16xf32> to vector<8x16xbf16>
    %56 = vector.extract_strided_slice %7 {offsets = [0, 32], sizes = [8, 16], strides = [1, 1]} : vector<8x64xf32> to vector<8x16xf32>
    %57 = arith.truncf %56 : vector<8x16xf32> to vector<8x16xbf16>
    %58 = tpu.transpose %55, [1, 0] : vector<8x16xbf16> -> vector<16x8xbf16>
    %cst_14 = arith.constant dense<0.000000e+00> : vector<8x8xf32>
    %59 = tpu.matmul %53, %58, %cst_14 {dimension_numbers = #tpu.dot_dimension_numbers<[1], [0], [0], [1], [0, 0, 1, 1], [], []>} : vector<8x16xbf16>, vector<16x8xbf16>, vector<8x8xf32> -> vector<8x8xf32>
    %cst_15 = arith.constant 2.500000e-01 : f32
    %60 = vector.broadcast %cst_15 : f32 to vector<8x8xf32>
    %61 = arith.mulf %59, %60 : vector<8x8xf32>
    %cst_16 = arith.constant dense<0xFF800000> : vector<8xf32>
    %62 = vector.multi_reduction <maximumf>, %61, %cst_16 [1] : vector<8x8xf32> to vector<8xf32>
    %63 = vector.shape_cast %62 : vector<8xf32> to vector<8x1xf32>
    %64 = vector.broadcast %63 : vector<8x1xf32> to vector<8x8xf32>
    %65 = arith.subf %61, %64 : vector<8x8xf32>
    %66 = math.exp %65 : vector<8x8xf32>
    %cst_17 = arith.constant dense<0.000000e+00> : vector<8xf32>
    %67 = vector.multi_reduction <add>, %66, %cst_17 [1] : vector<8x8xf32> to vector<8xf32>
    %68 = vector.shape_cast %67 : vector<8xf32> to vector<8x1xf32>
    %69 = tpu.reciprocal %68 {approx = true} : vector<8x1xf32> -> vector<8x1xf32>
    %70 = vector.broadcast %69 : vector<8x1xf32> to vector<8x8xf32>
    %71 = arith.mulf %66, %70 : vector<8x8xf32>
    %72 = arith.truncf %71 : vector<8x8xf32> to vector<8x8xbf16>
    %cst_18 = arith.constant dense<0.000000e+00> : vector<8x16xf32>
    %73 = tpu.matmul %72, %57, %cst_18 {dimension_numbers = #tpu.dot_dimension_numbers<[1], [0], [0], [1], [0, 0, 1, 1], [], []>} : vector<8x8xbf16>, vector<8x16xbf16>, vector<8x16xf32> -> vector<8x16xf32>
    %74 = vector.extract_strided_slice %5 {offsets = [0, 48], sizes = [8, 16], strides = [1, 1]} : vector<8x64xf32> to vector<8x16xf32>
    %75 = arith.truncf %74 : vector<8x16xf32> to vector<8x16xbf16>
    %76 = vector.extract_strided_slice %6 {offsets = [0, 48], sizes = [8, 16], strides = [1, 1]} : vector<8x64xf32> to vector<8x16xf32>
    %77 = arith.truncf %76 : vector<8x16xf32> to vector<8x16xbf16>
    %78 = vector.extract_strided_slice %7 {offsets = [0, 48], sizes = [8, 16], strides = [1, 1]} : vector<8x64xf32> to vector<8x16xf32>
    %79 = arith.truncf %78 : vector<8x16xf32> to vector<8x16xbf16>
    %80 = tpu.transpose %77, [1, 0] : vector<8x16xbf16> -> vector<16x8xbf16>
    %cst_19 = arith.constant dense<0.000000e+00> : vector<8x8xf32>
    %81 = tpu.matmul %75, %80, %cst_19 {dimension_numbers = #tpu.dot_dimension_numbers<[1], [0], [0], [1], [0, 0, 1, 1], [], []>} : vector<8x16xbf16>, vector<16x8xbf16>, vector<8x8xf32> -> vector<8x8xf32>
    %cst_20 = arith.constant 2.500000e-01 : f32
    %82 = vector.broadcast %cst_20 : f32 to vector<8x8xf32>
    %83 = arith.mulf %81, %82 : vector<8x8xf32>
    %cst_21 = arith.constant dense<0xFF800000> : vector<8xf32>
    %84 = vector.multi_reduction <maximumf>, %83, %cst_21 [1] : vector<8x8xf32> to vector<8xf32>
    %85 = vector.shape_cast %84 : vector<8xf32> to vector<8x1xf32>
    %86 = vector.broadcast %85 : vector<8x1xf32> to vector<8x8xf32>
    %87 = arith.subf %83, %86 : vector<8x8xf32>
    %88 = math.exp %87 : vector<8x8xf32>
    %cst_22 = arith.constant dense<0.000000e+00> : vector<8xf32>
    %89 = vector.multi_reduction <add>, %88, %cst_22 [1] : vector<8x8xf32> to vector<8xf32>
    %90 = vector.shape_cast %89 : vector<8xf32> to vector<8x1xf32>
    %91 = tpu.reciprocal %90 {approx = true} : vector<8x1xf32> -> vector<8x1xf32>
    %92 = vector.broadcast %91 : vector<8x1xf32> to vector<8x8xf32>
    %93 = arith.mulf %88, %92 : vector<8x8xf32>
    %94 = arith.truncf %93 : vector<8x8xf32> to vector<8x8xbf16>
    %cst_23 = arith.constant dense<0.000000e+00> : vector<8x16xf32>
    %95 = tpu.matmul %94, %79, %cst_23 {dimension_numbers = #tpu.dot_dimension_numbers<[1], [0], [0], [1], [0, 0, 1, 1], [], []>} : vector<8x8xbf16>, vector<8x16xbf16>, vector<8x16xf32> -> vector<8x16xf32>
    %96 = tpu.concatenate %29, %51, %73, %95 in 1 : vector<8x16xf32>, vector<8x16xf32>, vector<8x16xf32>, vector<8x16xf32> -> vector<8x64xf32>
    %97 = arith.truncf %96 : vector<8x64xf32> to vector<8x64xbf16>
    %c0_24 = arith.constant 0 : index
    %c0_25 = arith.constant 0 : index
    %98 = vector.load %arg3[%c0_24, %c0_25] : memref<64x32xbf16, #tpu.memory_space<vmem>>, vector<64x32xbf16>
    %cst_26 = arith.constant dense<0.000000e+00> : vector<8x32xf32>
    %99 = tpu.matmul %97, %98, %cst_26 {dimension_numbers = #tpu.dot_dimension_numbers<[1], [0], [0], [1], [0, 0, 1, 1], [], []>} : vector<8x64xbf16>, vector<64x32xbf16>, vector<8x32xf32> -> vector<8x32xf32>
    %c0_27 = arith.constant 0 : index
    %c0_28 = arith.constant 0 : index
    %100 = vector.load %arg4[%c0_27, %c0_28] : memref<1x32xf32, #tpu.memory_space<vmem>>, vector<1x32xf32>
    %101 = vector.broadcast %100 : vector<1x32xf32> to vector<8x32xf32>
    %102 = arith.addf %99, %101 : vector<8x32xf32>
    %c0_29 = arith.constant 0 : index
    %c0_30 = arith.constant 0 : index
    %c0_31 = arith.constant 0 : index
    %103 = vector.load %arg5[%c0_29, %c0_30, %c0_31] : memref<1x8x32xf32, #tpu.memory_space<vmem>>, vector<1x8x32xf32>
    %104 = vector.shape_cast %103 : vector<1x8x32xf32> to vector<8x32xf32>
    %105 = vector.shape_cast %102 : vector<8x32xf32> to vector<1x8x32xf32>
    tpu.vector_store %arg5[%c0_29, %c0_30, %c0_31], %105 {strides = array<i32>} : memref<1x8x32xf32, #tpu.memory_space<vmem>>, vector<1x8x32xf32>,
    return
  }
  func.func @transform_0(%arg0: i32) -> (i32, i32, i32) {
    %c0_i32 = arith.constant 0 : i32
    %c0_i32_0 = arith.constant 0 : i32
    %c0_i32_1 = arith.constant 0 : i32
    return %arg0, %c0_i32, %c0_i32_0 : i32, i32, i32
  }
  func.func @transform_1(%arg0: i32) -> (i32, i32) {
    %c0_i32 = arith.constant 0 : i32
    %c0_i32_0 = arith.constant 0 : i32
    %c0_i32_1 = arith.constant 0 : i32
    return %c0_i32, %c0_i32_0 : i32, i32
  }
  func.func @transform_2(%arg0: i32) -> (i32, i32) {
    %c0_i32 = arith.constant 0 : i32
    %c0_i32_0 = arith.constant 0 : i32
    %c0_i32_1 = arith.constant 0 : i32
    return %c0_i32, %c0_i32_0 : i32, i32
  }
  func.func @transform_3(%arg0: i32) -> (i32, i32) {
    %c0_i32 = arith.constant 0 : i32
    %c0_i32_0 = arith.constant 0 : i32
    %c0_i32_1 = arith.constant 0 : i32
    return %c0_i32, %c0_i32_0 : i32, i32
  }
  func.func @transform_4(%arg0: i32) -> (i32, i32, i32) {
    %c0_i32 = arith.constant 0 : i32
    %c0_i32_0 = arith.constant 0 : i32
    %c0_i32_1 = arith.constant 0 : i32
    return %arg0, %c0_i32, %c0_i32_0 : i32, i32, i32
  }
}

</mosaic_0001>

<llo_original>
// kernel: tpu_custom_call.1
$region0: #{tpu_custom_call.1}
  #allocation0 [shape = 'u32[]', space=smem, size = 0x4, offset = 0x4, fixed_abs, tag = 'smem constant byte address 0x4 - core index']
  #allocation1 [shape = 'u32[72,128]{1,0:T(1,128)}', space=vmem, size = 0x9000, scoped, tag = 'internal scratch']
  %s0 = inlined_call_operand.vmem [shape: f32[2,8,32], index: 0, kind: input, shape index: {}]
  %s1 = inlined_call_operand.vmem [shape: bf16[32,192], index: 1, kind: input, shape index: {}]
  %s2 = inlined_call_operand.vmem [shape: bf16[64,32], index: 2, kind: input, shape index: {}]
  %s3 = inlined_call_operand.vmem [shape: f32[1,32], index: 3, kind: input, shape index: {}]
  %s4 = inlined_call_operand.hbm [shape: f32[2,8,32], index: 4, kind: output, shape index: {}]
  %s5 = sld [smem:[#allocation0]]
  $region49: #{tpu_custom_call.1} parent=0
    _
  %s7 = ssub.s32 1, %s5
  %s8 = scalar_select 0, %s7, %s5
  $region1: #{tpu_custom_call.1} parent=0
    #allocation2 [shape = 'u8[8192]{0}', space=vmem, size = 0x2000, scoped, tag = 'output window, operand 0']
    #allocation3 [shape = 's32[2]{0}', space=sflag, size = 0x8, scoped, tag = 'scoped memory for tpu_custom_call.1']
    %9 = vsyncpa [#allocation3], 0
    %s10 = scalar_lea.sflag [#allocation3], 1
    %11 = vsyncpa %s10, 0
    loop: start=0, step=1, limit=4
    $region2: #{tpu_custom_call.1} parent=1 // loop_pre_header
      _
    $region3: #{tpu_custom_call.1} parent=1 // loop_header
      %s13 = sphi 0, %s17
      %p14 = scmp.ge.s32.totalorder %s13, 4
      %s23 = sphi 0, %s25
      %s26 = sphi 0, %s23
      %s27 = sphi 0, %s26
      %s43 = sphi 0, %s27
      %s47 = sphi 0, %s47
      %s49 = sphi 0, %s47
      %s50 = sphi 0, %s49
      %s64 = sphi 0, %s50
      %s68 = sphi 0, %s68
      %s70 = sphi 0, %s68
      %s71 = sphi 0, %s70
      %s85 = sphi 0, %s71
      %s89 = sphi 0, %s89
      %s91 = sphi 0, %s89
      %s92 = sphi 0, %s91
      %s106 = sphi 0, %s92
      %s112 = sphi 0, %s114
      %s115 = sphi 0, %s112
      %s116 = sphi 0, %s115
      %s132 = sphi 0, %s116
    $region4: #{tpu_custom_call.1} parent=1 // loop_header_branch
      %16 = sbr.rel (%p14) target = $region8
    $region5: #{tpu_custom_call.1} parent=1 // loop_body
      %s18 = ssub.s32 %s13, 1
      %s19 = ssub.s32 %s13, 2
      %s20 = sadd.s32 %s13, 1
      %s21 = ssub.s32 %s13, %s20
      %p22 = scmp.eq.s32.totalorder %s21, 0
      %s24 = sadd.s32 %s23, 1
      %s25 = scalar_select %p22, %s23, %s24
      %p28 = pneg %p22
      %p29 = scmp.eq.s32.totalorder %s13, 1
      %p30 = por %p28, %p29
      %p31 = scmp.ne.s32.totalorder %s23, %s26
      %p32 = scmp.eq.s32.totalorder %s13, 0
      %p33 = por %p31, %p32
      %p34 = scmp.ne.s32.totalorder %s23, %s26
      %p35 = scmp.eq.s32.totalorder %s18, 1
      %p36 = por %p34, %p35
      %p37 = scmp.ne.s32.totalorder %s26, %s27
      %p38 = scmp.eq.s32.totalorder %s18, 0
      %p39 = por %p37, %p38
      %p40 = scmp.ne.s32.totalorder %s26, %s27
      %p41 = scmp.eq.s32.totalorder %s19, 1
      %p42 = por %p40, %p41
      %p44 = scmp.ne.s32.totalorder %s27, %s43
      %p45 = scmp.eq.s32.totalorder %s19, 0
      %p46 = por %p44, %p45
      %s48 = sadd.s32 %s47, 1
      %p51 = scmp.eq.s32.totalorder %s13, 1
      %p52 = scmp.ne.s32.totalorder %s47, %s49
      %p53 = scmp.eq.s32.totalorder %s13, 0
      %p54 = por %p52, %p53
      %p55 = scmp.ne.s32.totalorder %s47, %s49
      %p56 = scmp.eq.s32.totalorder %s18, 1
      %p57 = por %p55, %p56
      %p58 = scmp.ne.s32.totalorder %s49, %s50
      %p59 = scmp.eq.s32.totalorder %s18, 0
      %p60 = por %p58, %p59
      %p61 = scmp.ne.s32.totalorder %s49, %s50
      %p62 = scmp.eq.s32.totalorder %s19, 1
      %p63 = por %p61, %p62
      %p65 = scmp.ne.s32.totalorder %s50, %s64
      %p66 = scmp.eq.s32.totalorder %s19, 0
      %p67 = por %p65, %p66
      %s69 = sadd.s32 %s68, 1
      %p72 = scmp.eq.s32.totalorder %s13, 1
      %p73 = scmp.ne.s32.totalorder %s68, %s70
      %p74 = scmp.eq.s32.totalorder %s13, 0
      %p75 = por %p73, %p74
      %p76 = scmp.ne.s32.totalorder %s68, %s70
      %p77 = scmp.eq.s32.totalorder %s18, 1
      %p78 = por %p76, %p77
      %p79 = scmp.ne.s32.totalorder %s70, %s71
      %p80 = scmp.eq.s32.totalorder %s18, 0
      %p81 = por %p79, %p80
      %p82 = scmp.ne.s32.totalorder %s70, %s71
      %p83 = scmp.eq.s32.totalorder %s19, 1
      %p84 = por %p82, %p83
      %p86 = scmp.ne.s32.totalorder %s71, %s85
      %p87 = scmp.eq.s32.totalorder %s19, 0
      %p88 = por %p86, %p87
      %s90 = sadd.s32 %s89, 1
      %p93 = scmp.eq.s32.totalorder %s13, 1
      %p94 = scmp.ne.s32.totalorder %s89, %s91
      %p95 = scmp.eq.s32.totalorder %s13, 0
      %p96 = por %p94, %p95
      %p97 = scmp.ne.s32.totalorder %s89, %s91
      %p98 = scmp.eq.s32.totalorder %s18, 1
      %p99 = por %p97, %p98
      %p100 = scmp.ne.s32.totalorder %s91, %s92
      %p101 = scmp.eq.s32.totalorder %s18, 0
      %p102 = por %p100, %p101
      %p103 = scmp.ne.s32.totalorder %s91, %s92
      %p104 = scmp.eq.s32.totalorder %s19, 1
      %p105 = por %p103, %p104
      %p107 = scmp.ne.s32.totalorder %s92, %s106
      %p108 = scmp.eq.s32.totalorder %s19, 0
      %p109 = por %p107, %p108
      %s110 = ssub.s32 %s13, %s20
      %p111 = scmp.eq.s32.totalorder %s110, 0
      %s113 = sadd.s32 %s112, 1
      %s114 = scalar_select %p111, %s112, %s113
      %p117 = pneg %p111
      %p118 = scmp.eq.s32.totalorder %s13, 1
      %p119 = por %p117, %p118
      %p120 = scmp.ne.s32.totalorder %s112, %s115
      %p121 = scmp.eq.s32.totalorder %s13, 0
      %p122 = por %p120, %p121
      %p123 = scmp.ne.s32.totalorder %s112, %s115
      %p124 = scmp.eq.s32.totalorder %s18, 1
      %p125 = por %p123, %p124
      %p126 = scmp.ne.s32.totalorder %s115, %s116
      %p127 = scmp.eq.s32.totalorder %s18, 0
      %p128 = por %p126, %p127
      %p129 = scmp.ne.s32.totalorder %s115, %s116
      %p130 = scmp.eq.s32.totalorder %s19, 1
      %p131 = por %p129, %p130
      %p133 = scmp.ne.s32.totalorder %s116, %s132
      %p134 = scmp.eq.s32.totalorder %s19, 0
      %p135 = por %p133, %p134
      %p136 = scmp.le.s32.totalorder 1, %s13
      %p137 = scmp.lt.s32.totalorder %s13, 3
      %p138 = pnand %p136, %p137
      %p139 = pneg %p138
      // Predicated region
      $region9: #{tpu_custom_call.1} parent=5 // pred_check
        _
      $region10: #{tpu_custom_call.1} parent=5 // pred_check_branch
        %141 = sbr.rel (%p138) target = $region12
      $region11: #{tpu_custom_call.1} parent=5 // pred_region
        %s142 = ssub.s32 %s13, 1
        // Predicated region
        $region13: #{tpu_custom_call.1} parent=11 // pred_check
          %p143 = pneg %p60
        $region14: #{tpu_custom_call.1} parent=11 // pred_check_branch
          %145 = sbr.rel (%p143) target = $region16
        $region15: #{tpu_custom_call.1} parent=11 // pred_region
          _
        $region16: #{tpu_custom_call.1} parent=11 // pred_fallthru
          _
        // Predicated region
        $region17: #{tpu_custom_call.1} parent=11 // pred_check
          %p146 = pneg %p81
        $region18: #{tpu_custom_call.1} parent=11 // pred_check_branch
          %148 = sbr.rel (%p146) target = $region20
        $region19: #{tpu_custom_call.1} parent=11 // pred_region
          _
        $region20: #{tpu_custom_call.1} parent=11 // pred_fallthru
          _
        // Predicated region
        $region21: #{tpu_custom_call.1} parent=11 // pred_check
          %p149 = pneg %p102
        $region22: #{tpu_custom_call.1} parent=11 // pred_check_branch
          %151 = sbr.rel (%p149) target = $region24
        $region23: #{tpu_custom_call.1} parent=11 // pred_region
          _
        $region24: #{tpu_custom_call.1} parent=11 // pred_fallthru
          _
      $region12: #{tpu_custom_call.1} parent=5 // pred_fallthru
        _
      %p152 = scmp.lt.s32.totalorder %s13, 2
      // Predicated region
      $region25: #{tpu_custom_call.1} parent=5 // pred_check
        %p153 = pneg %p152
      $region26: #{tpu_custom_call.1} parent=5 // pred_check_branch
        %155 = sbr.rel (%p153) target = $region28
      $region27: #{tpu_custom_call.1} parent=5 // pred_region
        // Predicated region
        $region29: #{tpu_custom_call.1} parent=27 // pred_check
          %p156 = pneg %p33
        $region30: #{tpu_custom_call.1} parent=27 // pred_check_branch
          %158 = sbr.rel (%p156) target = $region32
        $region31: #{tpu_custom_call.1} parent=27 // pred_region
          %p159 = scmp.lt.s32.totalorder %s13, 1
          %s160 = scalar_select %p159, %s13, 1
          %s161 = smul.addr %s160, 8
          %s162 = scalar_lea.vmem %s0, %s161
        $region32: #{tpu_custom_call.1} parent=27 // pred_fallthru
          _
      $region28: #{tpu_custom_call.1} parent=5 // pred_fallthru
        _
      %p163 = scmp.le.s32.totalorder 1, %s13
      %p164 = scmp.lt.s32.totalorder %s13, 3
      %p165 = pnand %p163, %p164
      %p166 = pneg %p165
      // Predicated region
      $region33: #{tpu_custom_call.1} parent=5 // pred_check
        _
      $region34: #{tpu_custom_call.1} parent=5 // pred_check_branch
        %168 = sbr.rel (%p165) target = $region36
      $region35: #{tpu_custom_call.1} parent=5 // pred_region
        %s169 = ssub.s32 %s13, 1
        %p170 = scmp.lt.s32.totalorder %s18, 1
        %s171 = scalar_select %p170, %s18, 1
        %s172 = smul.addr %s171, 8
        %s173 = scalar_lea.vmem %s0, %s172
        %p174 = pneg %p39
        %p175 = pneg %p36
        %p176 = pneg %p60
        %p177 = pneg %p57
        %p178 = pneg %p81
        %p179 = pneg %p78
        %p180 = pneg %p102
        %p181 = pneg %p99
        %p182 = pneg %p128
        %p183 = pneg %p125
        %s184 = sand.u32 %s115, 1
        %s185 = scalar_lea.sflag [#allocation3], %s184
        %s186 = sand.u32 %s115, 1
        %s187 = smul.addr %s186, 8
        %s188 = scalar_lea.vmem [#allocation2], %s187
        %p189 = scmp.lt.s32.totalorder %s18, 1
        %s190 = scalar_select %p189, %s18, 1
        %s191 = smul.addr %s190, 8
        %s192 = scalar_lea.vmem %s0, %s191
        %v194 = vld [vmem:[%s192] sm:$0xff]
        %v195 = vpack.c.bf16 %v194, %v194
        %v196 = vld [vmem:[%s1] sm:$0xff]
        %v197 = vld [vmem:[%s1 + $0x8] sm:$0xff]
        %v198 = vld [vmem:[%s1 + $0x10] sm:$0xff]
        %v199 = vld [vmem:[%s1 + $0x18] sm:$0xff]
        %v204 = vunpack.c.l.b16 %v196
        %v205 = vunpack.c.h.b16 %v196
        %v206 = vunpack.c.l.b16 %v197
        %v207 = vunpack.c.h.b16 %v197
        %v208 = vunpack.c.l.b16 %v198
        %v209 = vunpack.c.h.b16 %v198
        %v210 = vunpack.c.l.b16 %v199
        %v211 = vunpack.c.h.b16 %v199
        %v212 = vpack.c.b16 %v206, %v204
        %v213 = vpack.c.b16 %v207, %v205
        %v214 = vpack.c.b16 %v210, %v208
        %v215 = vpack.c.b16 %v211, %v209
        %vm220 = vcmask 261120
        %v222 = vsel %vm220, %v195, 0
        %224 = vmatpush.bf16.msra.mxu0 0
        %225 = vmatpush.bf16.msra.mxu0 0
        %226 = vmatpush.bf16.msra.mxu0 0
        %227 = vmatpush.bf16.msra.mxu0 0
        %228 = vmatpush.bf16.msra.mxu0 0
        %229 = vmatpush.bf16.msra.mxu0 0
        %230 = vmatpush.bf16.msra.mxu0 %v214
        %231 = vmatpush.bf16.msra.mxu0 %v212
        %232 = vmatmul.bf16.gmra.mxu0 %v222
        %v233 = vpop.f32.mrf.mxu0
        %v234 = vadd.f32 0.0, %v233
        %v235 = vpop.f32.mrf.mxu0
        %236 = vdwg.mxu0
        %237 = vmatpush.bf16.msra.mxu0 0
        %238 = vmatpush.bf16.msra.mxu0 0
        %239 = vmatpush.bf16.msra.mxu0 0
        %240 = vmatpush.bf16.msra.mxu0 0
        %241 = vmatpush.bf16.msra.mxu0 0
        %242 = vmatpush.bf16.msra.mxu0 0
        %243 = vmatpush.bf16.msra.mxu0 %v215
        %244 = vmatpush.bf16.msra.mxu0 %v213
        %245 = vmatmul.bf16.gmra.mxu0 %v222
        %v246 = vpop.f32.mrf.mxu0
        %v247 = vadd.f32 0.0, %v246
        %v248 = vpop.f32.mrf.mxu0
        %249 = vdwg.mxu0
        %v250 = vpack.c.bf16 %v234, %v234
        %v251 = vpack.c.bf16 %v247, %v247
        %253 = vrot.lane.b32.xlu0 %v250, 64
        %v254 = vpop.permute.xlu0 %253
        %vm255 = vcmask 130048
        %v257 = vsel %vm255, %v250, 0
        %v260 = vsel %vm255, %v254, 0
        %262 = vmatpush.bf16.xpose.msra.mxu0 0
        %263 = vmatpush.bf16.xpose.msra.mxu0 0
        %264 = vmatpush.bf16.xpose.msra.mxu0 0
        %265 = vmatpush.bf16.xpose.msra.mxu0 0
        %266 = vmatpush.bf16.xpose.msra.mxu0 0
        %267 = vmatpush.bf16.xpose.msra.mxu0 0
        %268 = vmatpush.bf16.xpose.msra.mxu0 0
        %269 = vmatpush.bf16.xpose.msra.mxu0 %v260
        %270 = vmatmul.bf16.gmra.mxu0 %v257
        %v271 = vpop.f32.mrf.mxu0
        %v272 = vadd.f32 0.0, %v271
        %v273 = vpop.f32.mrf.mxu0
        %274 = vdwg.mxu0
        %v275 = vmul.f32 %v272, 0.25
        %vm276 = vcmask 64512
        %v277 = vsel %vm276, %v275, -inf
        %278 = vmax.xlane.f32.xlu0 %v277
        %v279 = vpop.xlane.xlu0 %278
        %v280 = vsub.f32 %v275, %v279
        %v281 = vmul.f32 %v280, 1.442695
        %v282 = vpow.pop %v281
        %v283 = vsel %vm276, %v282, 0.0
        %284 = vadd.xlane.f32.xlu0 %v283
        %v285 = vpop.xlane.xlu0 %284
        %v286 = vrcp.pop %v285
        %v287 = vmul.f32 %v282, %v286
        %v288 = vpack.c.bf16 %v287, %v287
        %v290 = vsel %vm276, %v288, 0
        %vm292 = vcmask 1043456
        %v294 = vsel %vm292, %v251, 0
        %296 = vmatpush.bf16.msra.mxu0 0
        %297 = vmatpush.bf16.msra.mxu0 0
        %298 = vmatpush.bf16.msra.mxu0 0
        %299 = vmatpush.bf16.msra.mxu0 0
        %300 = vmatpush.bf16.msra.mxu0 0
        %301 = vmatpush.bf16.msra.mxu0 0
        %302 = vmatpush.bf16.msra.mxu0 0
        %303 = vmatpush.bf16.msra.mxu0 %v294
        %304 = vmatmul.bf16.gmra.mxu0 %v290
        %v305 = vpop.f32.mrf.mxu0
        %v306 = vadd.f32 0.0, %v305
        %v307 = vpop.f32.mrf.mxu0
        %308 = vdwg.mxu0
        %309 = vrot.lane.b32.xlu0 %v250, 112
        %v310 = vpop.permute.xlu0 %309
        %311 = vrot.lane.b32.xlu0 %v250, 48
        %v312 = vpop.permute.xlu0 %311
        %v314 = vsel %vm255, %v310, 0
        %v317 = vsel %vm255, %v312, 0
        %319 = vmatpush.bf16.xpose.msra.mxu0 0
        %320 = vmatpush.bf16.xpose.msra.mxu0 0
        %321 = vmatpush.bf16.xpose.msra.mxu0 0
        %322 = vmatpush.bf16.xpose.msra.mxu0 0
        %323 = vmatpush.bf16.xpose.msra.mxu0 0
        %324 = vmatpush.bf16.xpose.msra.mxu0 0
        %325 = vmatpush.bf16.xpose.msra.mxu0 0
        %326 = vmatpush.bf16.xpose.msra.mxu0 %v317
        %327 = vmatmul.bf16.gmra.mxu0 %v314
        %v328 = vpop.f32.mrf.mxu0
        %v329 = vadd.f32 0.0, %v328
        %v330 = vpop.f32.mrf.mxu0
        %331 = vdwg.mxu0
        %v332 = vmul.f32 %v329, 0.25
        %v333 = vsel %vm276, %v332, -inf
        %334 = vmax.xlane.f32.xlu0 %v333
        %v335 = vpop.xlane.xlu0 %334
        %v336 = vsub.f32 %v332, %v335
        %v337 = vmul.f32 %v336, 1.442695
        %v338 = vpow.pop %v337
        %v339 = vsel %vm276, %v338, 0.0
        %340 = vadd.xlane.f32.xlu0 %v339
        %v341 = vpop.xlane.xlu0 %340
        %v342 = vrcp.pop %v341
        %v343 = vmul.f32 %v338, %v342
        %v344 = vpack.c.bf16 %v343, %v343
        %346 = vrot.lane.b32.xlu0 %v251, 112
        %v347 = vpop.permute.xlu0 %346
        %v349 = vsel %vm276, %v344, 0
        %v352 = vsel %vm292, %v347, 0
        %354 = vmatpush.bf16.msra.mxu0 0
        %355 = vmatpush.bf16.msra.mxu0 0
        %356 = vmatpush.bf16.msra.mxu0 0
        %357 = vmatpush.bf16.msra.mxu0 0
        %358 = vmatpush.bf16.msra.mxu0 0
        %359 = vmatpush.bf16.msra.mxu0 0
        %360 = vmatpush.bf16.msra.mxu0 0
        %361 = vmatpush.bf16.msra.mxu0 %v352
        %362 = vmatmul.bf16.gmra.mxu0 %v349
        %v363 = vpop.f32.mrf.mxu0
        %v364 = vadd.f32 0.0, %v363
        %v365 = vpop.f32.mrf.mxu0
        %366 = vdwg.mxu0
        %367 = vrot.lane.b32.xlu0 %v250, 96
        %v368 = vpop.permute.xlu0 %367
        %369 = vrot.lane.b32.xlu0 %v250, 32
        %v370 = vpop.permute.xlu0 %369
        %v372 = vsel %vm255, %v368, 0
        %v375 = vsel %vm255, %v370, 0
        %377 = vmatpush.bf16.xpose.msra.mxu0 0
        %378 = vmatpush.bf16.xpose.msra.mxu0 0
        %379 = vmatpush.bf16.xpose.msra.mxu0 0
        %380 = vmatpush.bf16.xpose.msra.mxu0 0
        %381 = vmatpush.bf16.xpose.msra.mxu0 0
        %382 = vmatpush.bf16.xpose.msra.mxu0 0
        %383 = vmatpush.bf16.xpose.msra.mxu0 0
        %384 = vmatpush.bf16.xpose.msra.mxu0 %v375
        %385 = vmatmul.bf16.gmra.mxu0 %v372
        %v386 = vpop.f32.mrf.mxu0
        %v387 = vadd.f32 0.0, %v386
        %v388 = vpop.f32.mrf.mxu0
        %389 = vdwg.mxu0
        %v390 = vmul.f32 %v387, 0.25
        %v391 = vsel %vm276, %v390, -inf
        %392 = vmax.xlane.f32.xlu0 %v391
        %v393 = vpop.xlane.xlu0 %392
        %v394 = vsub.f32 %v390, %v393
        %v395 = vmul.f32 %v394, 1.442695
        %v396 = vpow.pop %v395
        %v397 = vsel %vm276, %v396, 0.0
        %398 = vadd.xlane.f32.xlu0 %v397
        %v399 = vpop.xlane.xlu0 %398
        %v400 = vrcp.pop %v399
        %v401 = vmul.f32 %v396, %v400
        %v402 = vpack.c.bf16 %v401, %v401
        %403 = vrot.lane.b32.xlu0 %v251, 96
        %v404 = vpop.permute.xlu0 %403
        %v406 = vsel %vm276, %v402, 0
        %v409 = vsel %vm292, %v404, 0
        %411 = vmatpush.bf16.msra.mxu0 0
        %412 = vmatpush.bf16.msra.mxu0 0
        %413 = vmatpush.bf16.msra.mxu0 0
        %414 = vmatpush.bf16.msra.mxu0 0
        %415 = vmatpush.bf16.msra.mxu0 0
        %416 = vmatpush.bf16.msra.mxu0 0
        %417 = vmatpush.bf16.msra.mxu0 0
        %418 = vmatpush.bf16.msra.mxu0 %v409
        %419 = vmatmul.bf16.gmra.mxu0 %v406
        %v420 = vpop.f32.mrf.mxu0
        %v421 = vadd.f32 0.0, %v420
        %v422 = vpop.f32.mrf.mxu0
        %423 = vdwg.mxu0
        %424 = vrot.lane.b32.xlu0 %v250, 80
        %v425 = vpop.permute.xlu0 %424
        %426 = vrot.lane.b32.xlu0 %v250, 16
        %v427 = vpop.permute.xlu0 %426
        %v429 = vsel %vm255, %v425, 0
        %v432 = vsel %vm255, %v427, 0
        %434 = vmatpush.bf16.xpose.msra.mxu0 0
        %435 = vmatpush.bf16.xpose.msra.mxu0 0
        %436 = vmatpush.bf16.xpose.msra.mxu0 0
        %437 = vmatpush.bf16.xpose.msra.mxu0 0
        %438 = vmatpush.bf16.xpose.msra.mxu0 0
        %439 = vmatpush.bf16.xpose.msra.mxu0 0
        %440 = vmatpush.bf16.xpose.msra.mxu0 0
        %441 = vmatpush.bf16.xpose.msra.mxu0 %v432
        %442 = vmatmul.bf16.gmra.mxu0 %v429
        %v443 = vpop.f32.mrf.mxu0
        %v444 = vadd.f32 0.0, %v443
        %v445 = vpop.f32.mrf.mxu0
        %446 = vdwg.mxu0
        %v447 = vmul.f32 %v444, 0.25
        %v448 = vsel %vm276, %v447, -inf
        %449 = vmax.xlane.f32.xlu0 %v448
        %v450 = vpop.xlane.xlu0 %449
        %v451 = vsub.f32 %v447, %v450
        %v452 = vmul.f32 %v451, 1.442695
        %v453 = vpow.pop %v452
        %v454 = vsel %vm276, %v453, 0.0
        %455 = vadd.xlane.f32.xlu0 %v454
        %v456 = vpop.xlane.xlu0 %455
        %v457 = vrcp.pop %v456
        %v458 = vmul.f32 %v453, %v457
        %v459 = vpack.c.bf16 %v458, %v458
        %460 = vrot.lane.b32.xlu0 %v251, 80
        %v461 = vpop.permute.xlu0 %460
        %v463 = vsel %vm276, %v459, 0
        %v466 = vsel %vm292, %v461, 0
        %468 = vmatpush.bf16.msra.mxu0 0
        %469 = vmatpush.bf16.msra.mxu0 0
        %470 = vmatpush.bf16.msra.mxu0 0
        %471 = vmatpush.bf16.msra.mxu0 0
        %472 = vmatpush.bf16.msra.mxu0 0
        %473 = vmatpush.bf16.msra.mxu0 0
        %474 = vmatpush.bf16.msra.mxu0 0
        %475 = vmatpush.bf16.msra.mxu0 %v466
        %476 = vmatmul.bf16.gmra.mxu0 %v463
        %v477 = vpop.f32.mrf.mxu0
        %v478 = vadd.f32 0.0, %v477
        %v479 = vpop.f32.mrf.mxu0
        %480 = vdwg.mxu0
        %482 = vrot.lane.b32.xlu0 %v364, 16
        %v483 = vpop.permute.xlu0 %482
        %486 = vrot.lane.b32.xlu0 %v421, 32
        %v487 = vpop.permute.xlu0 %486
        %490 = vrot.lane.b32.xlu0 %v478, 48
        %v491 = vpop.permute.xlu0 %490
        %v493 = vsel %vm255, %v306, %v483
        %v494 = vsel %vm220, %v493, %v487
        %vm495 = vcmask 392192
        %v496 = vsel %vm495, %v494, %v491
        %v497 = vpack.c.bf16 %v496, %v496
        %v498 = vld [vmem:[%s2] sm:$0xf]
        %v499 = vld [vmem:[%s2 + $0x4] sm:$0xf]
        %v500 = vld [vmem:[%s2 + $0x8] sm:$0xf]
        %v501 = vld [vmem:[%s2 + $0xc] sm:$0xf]
        %v502 = vld [vmem:[%s2 + $0x10] sm:$0xf]
        %v503 = vld [vmem:[%s2 + $0x14] sm:$0xf]
        %v504 = vld [vmem:[%s2 + $0x18] sm:$0xf]
        %v505 = vld [vmem:[%s2 + $0x1c] sm:$0xf]
        %v506 = vld [vmem:[%s3] sm:$0x1]
        %v508 = vperm.slane %v506, 0
        %v518 = vunpack.c.l.b16 %v498
        %v519 = vunpack.c.l.b16 %v499
        %v520 = vunpack.c.l.b16 %v500
        %v521 = vunpack.c.l.b16 %v501
        %v522 = vunpack.c.l.b16 %v502
        %v523 = vunpack.c.l.b16 %v503
        %v524 = vunpack.c.l.b16 %v504
        %v525 = vunpack.c.l.b16 %v505
        %v526 = vpack.c.b16 %v519, %v518
        %v527 = vpack.c.b16 %v521, %v520
        %v528 = vpack.c.b16 %v523, %v522
        %v529 = vpack.c.b16 %v525, %v524
        %vm534 = vcmask 523264
        %v536 = vsel %vm534, %v497, 0
        %538 = vmatpush.bf16.msra.mxu0 0
        %539 = vmatpush.bf16.msra.mxu0 0
        %540 = vmatpush.bf16.msra.mxu0 0
        %541 = vmatpush.bf16.msra.mxu0 0
        %542 = vmatpush.bf16.msra.mxu0 %v529
        %543 = vmatpush.bf16.msra.mxu0 %v528
        %544 = vmatpush.bf16.msra.mxu0 %v527
        %545 = vmatpush.bf16.msra.mxu0 %v526
        %546 = vmatmul.bf16.gmra.mxu0 %v536
        %v547 = vpop.f32.mrf.mxu0
        %v548 = vadd.f32 %v508, %v547
        %v549 = vpop.f32.mrf.mxu0
        %550 = vdwg.mxu0
        %551 = vst.msk [vmem:[%s188] sm:$0xff] %vm220, %v548
        %s552 = sand.u32 %s115, 1
        %s553 = scalar_lea.sflag [#allocation3], %s552
        %s554 = sand.u32 %s115, 1
        %s555 = smul.addr %s554, 8
        %s556 = scalar_lea.vmem [#allocation2], %s555
        // Predicated region
        $region37: #{tpu_custom_call.1} parent=35 // pred_check
          %p557 = pneg %p125
        $region38: #{tpu_custom_call.1} parent=35 // pred_check_branch
          %559 = sbr.rel (%p557) target = $region40
        $region39: #{tpu_custom_call.1} parent=35 // pred_region
          %561 = vsyncadd %s553, 0
          %s562 = smul.addr %s18, 8
          %s563 = scalar_lea.hbm %s4, %s562
          %s565 = sshll.u32 %s556, 4
          %s566 = int_to_ptr.vmem [resolvable:$true] %s565
          %s567 = sshll.u32 %s563, 4
          %s568 = int_to_ptr.hbm [resolvable:$true] %s567
          %570 = dma.vmem_to_hbm [thread:$0]  %s566, 128, %s568, %s553
        $region40: #{tpu_custom_call.1} parent=35 // pred_fallthru
          _
      $region36: #{tpu_custom_call.1} parent=5 // pred_fallthru
        _
      %p571 = scmp.le.s32.totalorder 2, %s13
      // Predicated region
      $region41: #{tpu_custom_call.1} parent=5 // pred_check
        %p572 = pneg %p571
      $region42: #{tpu_custom_call.1} parent=5 // pred_check_branch
        %574 = sbr.rel (%p572) target = $region44
      $region43: #{tpu_custom_call.1} parent=5 // pred_region
        %s575 = ssub.s32 %s13, 2
        // Predicated region
        $region45: #{tpu_custom_call.1} parent=43 // pred_check
          %p576 = pneg %p131
        $region46: #{tpu_custom_call.1} parent=43 // pred_check_branch
          %578 = sbr.rel (%p576) target = $region48
        $region47: #{tpu_custom_call.1} parent=43 // pred_region
          %s579 = sand.u32 %s116, 1
          %s580 = scalar_lea.sflag [#allocation3], %s579
          %s581 = sand.u32 %s116, 1
          %s582 = smul.addr %s581, 8
          %s583 = scalar_lea.vmem [#allocation2], %s582
          %585 = dma.done %s580, 128
        $region48: #{tpu_custom_call.1} parent=43 // pred_fallthru
          _
      $region44: #{tpu_custom_call.1} parent=5 // pred_fallthru
        _
    $region6: #{tpu_custom_call.1} parent=1 // loop_footer
      %s17 = sadd.s32 1, %s13
    $region7: #{tpu_custom_call.1} parent=1 // loop_footer_branch
      %12 = sbr.rel target = $region3
    $region8: #{tpu_custom_call.1} parent=1 // loop_exit
      _
    %586 = vsyncpa [#allocation3], 1
    %s587 = scalar_lea.sflag [#allocation3], 1
    %588 = vsyncpa %s587, 1

</llo_original>
